<compile_context>
chip_gen: v7x
topology: tpu7x:2x2x1
jax: 0.10.0
libtpu: 0.0.40
codegen_flags: <defaults>
</compile_context>

<pallas_src>
import math

import jax
import jax.numpy as jnp
from jax.experimental import pallas as pl
from jax.experimental.pallas import tpu as pltpu


def _build_pe_table(d_model: int, max_len: int = 5000, dtype=jnp.float32):
    """Sinusoidal positional-encoding table, identical to the PyTorch init."""
    position = jnp.arange(0, max_len, dtype=jnp.float32)[:, None]            # (L, 1)
    div_term = jnp.exp(
        jnp.arange(0, d_model, 2, dtype=jnp.float32) * -(math.log(10000.0) / d_model)
    )                                                                         # (d/2,)
    angles = position * div_term                                              # (L, d/2)
    pe = jnp.zeros((max_len, d_model), dtype=jnp.float32)
    pe = pe.at[:, 0::2].set(jnp.sin(angles))
    pe = pe.at[:, 1::2].set(jnp.cos(angles))
    return pe.astype(dtype)                                                   # (L, d_model)


def _pe_add_kernel(x_ref, pe_ref, o_ref):
    # x_ref: (B, tF); pe_ref: (1, tF).  Leading-(sublane-)dim broadcast add —
    # a free VPU op on this DMA-bound kernel.
    o_ref[...] = x_ref[...] + pe_ref[...]


_LANE = 128
_TINY_BYTES = 1 << 20          # below this, one fat tile / single grid step
_TARGET_TILE_BYTES = 8 << 20   # per x/out tile; 2 streams x 2 bufs x 8 MiB + pe < 48 MiB
_MAX_VMEM_BYTES = 48 << 20     # safe under v7x's 64 MiB physical VMEM (128 MiB on v5e/v6e)


def _choose_tile_f(B: int, F: int, itemsize: int) -> int:
    """Pick the lane-axis tile size tF (multiple of 128, or full F)."""
    total = B * F * itemsize
    if total <= _TINY_BYTES or F <= _LANE:
        # Tiny problem: single tile, single grid step (avoid per-step overhead).
        return F
    tF = max(_LANE, (_TARGET_TILE_BYTES // (B * itemsize)) // _LANE * _LANE)
    # Keep at least two grid steps on non-tiny shapes so both v7x TensorCores
    # (megacore "parallel" axis) get work.
    n_lane_blocks = pl.cdiv(F, _LANE)
    if n_lane_blocks >= 2:
        tF = min(tF, max(_LANE, (n_lane_blocks // 2) * _LANE))
    return min(tF, F)


def positional_encoding_forward(x, pe_full):
    """x: (B, S, D). pe_full: (max_len, D). Returns x + pe[:S] (dropout = identity)."""
    B, S, D = x.shape
    if S > pe_full.shape[0]:
        raise ValueError(f"sequence length {S} exceeds pe table max_len {pe_full.shape[0]}")

    itemsize = jnp.dtype(x.dtype).itemsize
    pe = pe_full[:S].astype(x.dtype)  # store/add in x.dtype (no implicit upcast)

    # Flatten the trailing (S, D) dims so the lane axis is long and dense:
    # broadcast semantics are unchanged since pe only repeats along batch.
    F = S * D
    x2 = x.reshape(B, F)       # free metadata reshape (contiguous)
    pe2 = pe.reshape(1, F)

    tF = _choose_tile_f(B, F, itemsize)
    grid = (pl.cdiv(F, tF),)   # ragged last block handled by Pallas; no jnp.pad

    tile_bytes = B * tF * itemsize
    pe_tile_bytes = tF * itemsize
    vmem_needed = 2 * (2 * tile_bytes + pe_tile_bytes) + (1 << 20)  # double-buffered streams + slack
    vmem_limit = int(min(_MAX_VMEM_BYTES, max(vmem_needed, 16 << 20)))

    cost = pl.CostEstimate(
        flops=B * F,  # one VPU add per element
        transcendentals=0,
        bytes_accessed=2 * B * F * itemsize + F * itemsize,
    )

    out2 = pl.pallas_call(
        _pe_add_kernel,
        out_shape=jax.ShapeDtypeStruct((B, F), x.dtype),
        grid_spec=pltpu.PrefetchScalarGridSpec(
            num_scalar_prefetch=0,
            grid=grid,
            in_specs=[
                pl.BlockSpec((B, tF), lambda f: (0, f)),  # x tile (full batch, lane chunk)
                pl.BlockSpec((1, tF), lambda f: (0, f)),  # pe tile (batch-broadcast)
            ],
            out_specs=pl.BlockSpec((B, tF), lambda f: (0, f)),
        ),
        input_output_aliases={0: 0},  # x may be updated in place when donated
        compiler_params=pltpu.CompilerParams(
            dimension_semantics=("parallel",),   # disjoint output blocks -> megacore-safe
            vmem_limit_bytes=vmem_limit,
        ),
        cost_estimate=cost,
    )(x2, pe2)

    return out2.reshape(B, S, D)


if __name__ == "__main__":
    # Small shapes consistent with the module's forward: (batch, seq, d_model)
    B, S, D = 2, 8, 32
    d_model = D
    dropout_p = 0.1  # unused at inference (identity)
    max_len = 5000

    key = jax.random.PRNGKey(0)
    x = jax.random.normal(key, (B, S, D), dtype=jnp.float32)

    pe_full = _build_pe_table(d_model, max_len=max_len, dtype=jnp.float32)

    # Reference in plain JAX (eval-mode dropout == identity); computed before
    # the kernel call since the kernel is alias-capable on its first operand.
    ref = x + pe_full[None, :S, :]

    out = positional_encoding_forward(x, pe_full)
    out = jax.block_until_ready(out)

    assert out.shape == (B, S, D)
    assert jnp.allclose(out, ref, atol=1e-6, rtol=1e-6), "mismatch vs reference"

    print("KERNEL_OK")
</pallas_src>

<mosaic_0001>
module attributes {stable_mosaic.version = 11 : i64} {
  func.func @_pe_add_kernel(%arg0: i32, %arg1: memref<2x256xf32, #tpu.memory_space<vmem>>, %arg2: memref<1x256xf32, #tpu.memory_space<vmem>>, %arg3: memref<2x256xf32, #tpu.memory_space<vmem>>) attributes {dimension_semantics = [#tpu.dimension_semantics<parallel>], iteration_bounds = array<i64: 1>, scalar_prefetch = 0 : i64, scratch_operands = 0 : i64, tpu.core_type = #tpu.core_type<tc>, window_params = [{transform_indices = @transform_0, window_bounds = array<i64: 2, 256>}, {transform_indices = @transform_1, window_bounds = array<i64: 1, 256>}, {transform_indices = @transform_2, window_bounds = array<i64: 2, 256>}]} {
    %c0 = arith.constant 0 : index
    %c0_0 = arith.constant 0 : index
    %0 = vector.load %arg1[%c0, %c0_0] : memref<2x256xf32, #tpu.memory_space<vmem>>, vector<2x256xf32>
    %c0_1 = arith.constant 0 : index
    %c0_2 = arith.constant 0 : index
    %1 = vector.load %arg2[%c0_1, %c0_2] : memref<1x256xf32, #tpu.memory_space<vmem>>, vector<1x256xf32>
    %2 = vector.broadcast %1 : vector<1x256xf32> to vector<2x256xf32>
    %3 = arith.addf %0, %2 : vector<2x256xf32>
    %c0_3 = arith.constant 0 : index
    %c0_4 = arith.constant 0 : index
    %4 = vector.load %arg3[%c0_3, %c0_4] : memref<2x256xf32, #tpu.memory_space<vmem>>, vector<2x256xf32>
    tpu.vector_store %arg3[%c0_3, %c0_4], %3 {strides = array<i32>} : memref<2x256xf32, #tpu.memory_space<vmem>>, vector<2x256xf32>,
    return
  }
  func.func @transform_0(%arg0: i32) -> (i32, i32) {
    %c0_i32 = arith.constant 0 : i32
    %c0_i32_0 = arith.constant 0 : i32
    return %c0_i32, %arg0 : i32, i32
  }
  func.func @transform_1(%arg0: i32) -> (i32, i32) {
    %c0_i32 = arith.constant 0 : i32
    %c0_i32_0 = arith.constant 0 : i32
    return %c0_i32, %arg0 : i32, i32
  }
  func.func @transform_2(%arg0: i32) -> (i32, i32) {
    %c0_i32 = arith.constant 0 : i32
    %c0_i32_0 = arith.constant 0 : i32
    return %c0_i32, %arg0 : i32, i32
  }
}

</mosaic_0001>

<llo_original>
// kernel: tpu_custom_call.1
$region0: #{tpu_custom_call.1}
  #allocation0 [shape = 'u32[]', space=smem, size = 0x4, offset = 0x4, fixed_abs, tag = 'smem constant byte address 0x4 - core index']
  #allocation1 [shape = 'u32[144,128]{1,0:T(1,128)}', space=vmem, size = 0x12000, scoped, tag = 'internal scratch']
  %s0 = inlined_call_operand.hbm [shape: f32[2,256], index: 0, kind: input, shape index: {}, may-alias: {0,2}]
  %s1 = inlined_call_operand.vmem [shape: f32[1,256], index: 1, kind: input, shape index: {}]
  %s2 = inlined_call_operand.hbm [shape: f32[2,256], index: 2, kind: output, shape index: {}, may-alias: {0,2}]
  %s3 = sld [smem:[#allocation0]]
  $region22: #{tpu_custom_call.1} parent=0
    _
  %s5 = ssub.s32 1, %s3
  %s6 = scalar_select 0, %s5, %s3
  $region1: #{tpu_custom_call.1} parent=0
    #allocation2 [shape = 'u8[2048]{0}', space=vmem, size = 0x800, scoped, tag = 'input window, operand 0, single buffered']
    #allocation3 [shape = 's32[1]{0}', space=sflag, size = 0x4, scoped, tag = 'scoped memory for tpu_custom_call.1']
    #allocation4 [shape = 's32[1]{0}', space=sflag, size = 0x4, scoped, tag = 'scoped memory for tpu_custom_call.1']
    #allocation5 [shape = 'u8[2048]{0}', space=vmem, size = 0x800, scoped, tag = 'output window, operand 0, single buffered']
    %7 = vsyncpa [#allocation3], 0
    %8 = vsyncpa [#allocation4], 0
    // Predicated region
    $region2: #{tpu_custom_call.1} parent=1 // pred_check
      _
    $region3: #{tpu_custom_call.1} parent=1 // pred_check_branch
      %10 = sbr.rel (0) target = $region5
    $region4: #{tpu_custom_call.1} parent=1 // pred_region
      %s12 = ssub.s32 64, 64
      %13 = vsyncadd [#allocation3], %s12
      %s15 = sshll.u32 [#allocation2], 4
      %s16 = int_to_ptr.vmem [resolvable:$true] %s15
      %18 = dma.hbm_to_vmem [thread:$0]  %s0, 64, %s16, [#allocation3]
    $region5: #{tpu_custom_call.1} parent=1 // pred_fallthru
      _
    // Predicated region
    $region6: #{tpu_custom_call.1} parent=1 // pred_check
      _
    $region7: #{tpu_custom_call.1} parent=1 // pred_check_branch
      %20 = sbr.rel (0) target = $region9
    $region8: #{tpu_custom_call.1} parent=1 // pred_region
      _
    $region9: #{tpu_custom_call.1} parent=1 // pred_fallthru
      _
    // Predicated region
    $region10: #{tpu_custom_call.1} parent=1 // pred_check
      _
    $region11: #{tpu_custom_call.1} parent=1 // pred_check_branch
      %22 = sbr.rel (0) target = $region13
    $region12: #{tpu_custom_call.1} parent=1 // pred_region
      %23 = dma.done [#allocation3], 64
    $region13: #{tpu_custom_call.1} parent=1 // pred_fallthru
      _
    %v24 = vld [vmem:[#allocation2] sm:$0xf]
    %v25 = vld [vmem:[%s1] sm:$0x3]
    %v27 = vlaneseq
    %v28 = vshrl.u32 %v27, 7
    %v29 = vsub.s32 0, %v28
    %v30 = vrot.slane %v25, %v29
    %v31 = vlaneseq
    %v32 = vshrl.u32 %v31, 7
    %v33 = vsub.s32 1, %v32
    %v34 = vrot.slane %v25, %v33
    %v35 = vcombine.low %v30, %v34
    %v37 = vunpack.c.l.s4 1983009808
    %v38 = vunpack.c.0.s8 %v37
    %v39 = vlaneseq
    %v40 = vshrl.u32 %v39, 7
    %v41 = vsub.s32 %v38, %v40
    %v42 = vrot.slane %v35, %v41
    %v44 = vadd.f32 %v24, %v42
    %45 = vst [vmem:[#allocation5] sm:$0xf] %v44
    // Predicated region
    $region14: #{tpu_custom_call.1} parent=1 // pred_check
      _
    $region15: #{tpu_custom_call.1} parent=1 // pred_check_branch
      %47 = sbr.rel (0) target = $region17
    $region16: #{tpu_custom_call.1} parent=1 // pred_region
      %s49 = ssub.s32 64, 64
      %50 = vsyncadd [#allocation4], %s49
      %s52 = sshll.u32 [#allocation5], 4
      %s53 = int_to_ptr.vmem [resolvable:$true] %s52
      %55 = dma.vmem_to_hbm [thread:$0]  %s53, 64, %s2, [#allocation4]
    $region17: #{tpu_custom_call.1} parent=1 // pred_fallthru
      _
    // Predicated region
    $region18: #{tpu_custom_call.1} parent=1 // pred_check
      _
    $region19: #{tpu_custom_call.1} parent=1 // pred_check_branch
      %57 = sbr.rel (0) target = $region21
    $region20: #{tpu_custom_call.1} parent=1 // pred_region
      %58 = dma.done [#allocation4], 64
    $region21: #{tpu_custom_call.1} parent=1 // pred_fallthru
      _
    %59 = vsyncpa [#allocation3], 1
    %60 = vsyncpa [#allocation4], 1

</llo_original>
